<compile_context>
chip_gen: v6e
topology: v6e:2x2x1
jax: 0.10.0
libtpu: 0.0.40
codegen_flags: <defaults>
</compile_context>

<pallas_src>
import functools

import jax
import jax.numpy as jnp
from jax import lax
from jax.experimental import pallas as pl
from jax.experimental.pallas import tpu as pltpu


def _stack_ln_kernel(x_ref, p_ref, o_ref, *, C, eps):
    # x_ref: (T_N, C2, T_HW) tile; channels on sublanes, spatial lane-dense.
    # p_ref: (3, C2, 1) fp32; rows = [weight, bias, v-half mask].
    x = x_ref[...].astype(jnp.float32)            # (T_N, C2, T_HW)
    w = p_ref[0:1]                                # (1, C2, 1)
    b = p_ref[1:2]                                # (1, C2, 1)
    mask_v = p_ref[2:3]                           # (1, C2, 1): 1.0 for v-half
    mask_h = 1.0 - mask_v

    inv_c = 1.0 / float(C)

    # Per-half means (sum over all channels minus the v-half sum gives h-half).
    s_all = jnp.sum(x, axis=1, keepdims=True)                 # (T_N, 1, T_HW)
    s_v = jnp.sum(x * mask_v, axis=1, keepdims=True)
    mean_v = s_v * inv_c
    mean_h = (s_all - s_v) * inv_c
    mean = mask_v * mean_v + mask_h * mean_h                  # (T_N, C2, T_HW)

    # Two-pass (centered) biased variance, as in torch.nn.LayerNorm.
    cen = x - mean
    sq = cen * cen
    q_all = jnp.sum(sq, axis=1, keepdims=True)
    q_v = jnp.sum(sq * mask_v, axis=1, keepdims=True)
    inv_std_v = lax.rsqrt(q_v * inv_c + eps)                  # compact shapes
    inv_std_h = lax.rsqrt((q_all - q_v) * inv_c + eps)
    inv_std = mask_v * inv_std_v + mask_h * inv_std_h         # (T_N, C2, T_HW)

    # Single full-tile store (no sublane-masked half stores).
    o_ref[...] = ((cen * inv_std) * w + b).astype(o_ref.dtype)


def stack_layer_norm(x, v_weight, v_bias, h_weight, h_bias, *, eps=1e-5):
    """x: (N, 2*C, H, W) NCHW; params: (C,) each. Returns (N, 2*C, H, W)."""
    N, C2, H, W = x.shape
    assert C2 % 2 == 0
    C = C2 // 2
    HW = H * W
    itemsize = jnp.dtype(x.dtype).itemsize

    # Free reshape: spatial flattened, NCHW layout preserved (no HBM passes).
    xr = x.reshape(N, C2, HW)

    # Merged fp32 params + v-half mask: (3, C2, 1).
    w = jnp.concatenate([v_weight, h_weight]).astype(jnp.float32)
    b = jnp.concatenate([v_bias, h_bias]).astype(jnp.float32)
    mask = (jnp.arange(C2) < C).astype(jnp.float32)
    params = jnp.stack([w, b, mask], axis=0)[:, :, None]

    # Tile sizing: fold batch into the block (fully contiguous DMA per item),
    # only tile spatial when a single item already exceeds the budget.
    LANE = 128
    TARGET = 2 * 1024 * 1024          # per-buffer tile bytes (safe v5e..v7x)
    item_bytes = C2 * HW * itemsize
    if item_bytes <= TARGET:
        T_HW = HW
        T_N = max(1, min(N, TARGET // max(1, item_bytes)))
        if N > 1:
            # Keep >= 2 grid steps so v7x megacore can use both TensorCores.
            T_N = min(T_N, pl.cdiv(N, 2))
    else:
        T_N = 1
        T_HW = max(LANE, ((TARGET // max(1, C2 * itemsize)) // LANE) * LANE)
        if T_HW >= HW:
            T_HW = HW

    grid = (pl.cdiv(N, T_N), pl.cdiv(HW, T_HW))

    # VMEM budget: 2x in + 2x out double-buffered tiles + ~6 fp32-tile
    # temporaries + slack. Clamped under v7x's 64 MiB physical per TC.
    tile_bytes = T_N * C2 * T_HW * itemsize
    f32_tile = T_N * C2 * T_HW * 4
    vmem_limit = 4 * tile_bytes + 6 * f32_tile + (4 << 20)
    vmem_limit = int(min(max(vmem_limit, 16 << 20), 48 << 20))

    cost = pl.CostEstimate(
        flops=13 * N * C2 * HW,
        transcendentals=2 * N * HW,
        bytes_accessed=2 * N * C2 * HW * itemsize,
    )

    out = pl.pallas_call(
        functools.partial(_stack_ln_kernel, C=C, eps=eps),
        out_shape=jax.ShapeDtypeStruct((N, C2, HW), x.dtype),
        grid=grid,
        in_specs=[
            pl.BlockSpec((T_N, C2, T_HW), lambda n, j: (n, 0, j)),
            pl.BlockSpec((3, C2, 1), lambda n, j: (0, 0, 0)),
        ],
        out_specs=pl.BlockSpec((T_N, C2, T_HW), lambda n, j: (n, 0, j)),
        compiler_params=pltpu.CompilerParams(
            dimension_semantics=("parallel", "parallel"),
            vmem_limit_bytes=vmem_limit),
        cost_estimate=cost,
    )(xr, params)

    return out.reshape(N, C2, H, W)


def _reference(x, v_weight, v_bias, h_weight, h_bias, eps=1e-5):
    # Pure-JAX reference mirroring the PyTorch module (NHWC LayerNorm per half).
    N, C2, H, W = x.shape
    C = C2 // 2
    xn = jnp.transpose(x, (0, 2, 3, 1)).astype(jnp.float32)  # NHWC

    def ln(z, w, b):
        mean = jnp.mean(z, axis=-1, keepdims=True)
        var = jnp.mean((z - mean) ** 2, axis=-1, keepdims=True)
        return (z - mean) / jnp.sqrt(var + eps) * w + b

    v = ln(xn[..., :C], v_weight, v_bias)
    h = ln(xn[..., C:], h_weight, h_bias)
    y = jnp.concatenate([v, h], axis=-1)
    return jnp.transpose(y, (0, 3, 1, 2)).astype(x.dtype)


if __name__ == "__main__":
    key = jax.random.PRNGKey(0)
    k_x, k_vw, k_vb, k_hw, k_hb, k_x2 = jax.random.split(key, 6)

    n_filters = 4           # each stack has 4 channels -> 8 total
    N, H, W = 2, 16, 16
    x = jax.random.normal(k_x, (N, 2 * n_filters, H, W), dtype=jnp.float32)

    # Non-trivial affine params so the scale/shift path is exercised.
    v_weight = 1.0 + 0.1 * jax.random.normal(k_vw, (n_filters,), jnp.float32)
    v_bias = 0.1 * jax.random.normal(k_vb, (n_filters,), jnp.float32)
    h_weight = 1.0 + 0.1 * jax.random.normal(k_hw, (n_filters,), jnp.float32)
    h_bias = 0.1 * jax.random.normal(k_hb, (n_filters,), jnp.float32)

    out = stack_layer_norm(x, v_weight, v_bias, h_weight, h_bias)
    out = jax.block_until_ready(out)
    ref = _reference(x, v_weight, v_bias, h_weight, h_bias)
    assert out.shape == x.shape and out.dtype == x.dtype
    assert jnp.max(jnp.abs(out - ref)) < 1e-4

    # Second check: spatial size not a multiple of 128 and odd batch tail
    # handling (no wrapper pad/slice anywhere).
    H2, W2 = 9, 9
    x2 = jax.random.normal(k_x2, (N, 2 * n_filters, H2, W2), dtype=jnp.float32)
    out2 = stack_layer_norm(x2, v_weight, v_bias, h_weight, h_bias)
    out2 = jax.block_until_ready(out2)
    ref2 = _reference(x2, v_weight, v_bias, h_weight, h_bias)
    assert out2.shape == x2.shape
    assert jnp.max(jnp.abs(out2 - ref2)) < 1e-4

    print("KERNEL_OK")
</pallas_src>

<mosaic_0001>
module attributes {stable_mosaic.version = 11 : i64} {
  func.func @_stack_ln_kernel(%arg0: i32, %arg1: i32, %arg2: memref<1x8x256xf32, #tpu.memory_space<vmem>>, %arg3: memref<3x8x1xf32, #tpu.memory_space<vmem>>, %arg4: memref<1x8x256xf32, #tpu.memory_space<vmem>>) attributes {dimension_semantics = [#tpu.dimension_semantics<parallel>, #tpu.dimension_semantics<parallel>], iteration_bounds = array<i64: 2, 1>, scalar_prefetch = 0 : i64, scratch_operands = 0 : i64, tpu.core_type = #tpu.core_type<tc>, window_params = [{transform_indices = @transform_0, window_bounds = array<i64: 1, 8, 256>}, {pipeline_mode = #tpu.pipeline_mode<synchronous>, transform_indices = @transform_1, window_bounds = array<i64: 3, 8, 1>}, {transform_indices = @transform_2, window_bounds = array<i64: 1, 8, 256>}]} {
    %c0 = arith.constant 0 : index
    %c0_0 = arith.constant 0 : index
    %c0_1 = arith.constant 0 : index
    %0 = vector.load %arg2[%c0, %c0_0, %c0_1] : memref<1x8x256xf32, #tpu.memory_space<vmem>>, vector<1x8x256xf32>
    %c0_2 = arith.constant 0 : index
    %c0_3 = arith.constant 0 : index
    %c0_4 = arith.constant 0 : index
    %1 = vector.load %arg3[%c0_2, %c0_3, %c0_4] : memref<3x8x1xf32, #tpu.memory_space<vmem>>, vector<1x8x1xf32>
    %c1 = arith.constant 1 : index
    %c0_5 = arith.constant 0 : index
    %c0_6 = arith.constant 0 : index
    %2 = vector.load %arg3[%c1, %c0_5, %c0_6] : memref<3x8x1xf32, #tpu.memory_space<vmem>>, vector<1x8x1xf32>
    %c2 = arith.constant 2 : index
    %c0_7 = arith.constant 0 : index
    %c0_8 = arith.constant 0 : index
    %3 = vector.load %arg3[%c2, %c0_7, %c0_8] : memref<3x8x1xf32, #tpu.memory_space<vmem>>, vector<1x8x1xf32>
    %cst = arith.constant 1.000000e+00 : f32
    %4 = vector.broadcast %cst : f32 to vector<1x8x1xf32>
    %5 = arith.subf %4, %3 : vector<1x8x1xf32>
    %cst_9 = arith.constant dense<0.000000e+00> : vector<1x256xf32>
    %6 = vector.multi_reduction <add>, %0, %cst_9 [1] : vector<1x8x256xf32> to vector<1x256xf32>
    %7 = vector.shape_cast %6 : vector<1x256xf32> to vector<1x1x256xf32>
    %8 = vector.broadcast %3 : vector<1x8x1xf32> to vector<1x8x256xf32>
    %9 = arith.mulf %0, %8 : vector<1x8x256xf32>
    %cst_10 = arith.constant dense<0.000000e+00> : vector<1x256xf32>
    %10 = vector.multi_reduction <add>, %9, %cst_10 [1] : vector<1x8x256xf32> to vector<1x256xf32>
    %11 = vector.shape_cast %10 : vector<1x256xf32> to vector<1x1x256xf32>
    %cst_11 = arith.constant 2.500000e-01 : f32
    %12 = vector.broadcast %cst_11 : f32 to vector<1x1x256xf32>
    %13 = arith.mulf %11, %12 : vector<1x1x256xf32>
    %14 = arith.subf %7, %11 : vector<1x1x256xf32>
    %cst_12 = arith.constant 2.500000e-01 : f32
    %15 = vector.broadcast %cst_12 : f32 to vector<1x1x256xf32>
    %16 = arith.mulf %14, %15 : vector<1x1x256xf32>
    %17 = vector.broadcast %3 : vector<1x8x1xf32> to vector<1x8x256xf32>
    %18 = vector.broadcast %13 : vector<1x1x256xf32> to vector<1x8x256xf32>
    %19 = arith.mulf %17, %18 : vector<1x8x256xf32>
    %20 = vector.broadcast %5 : vector<1x8x1xf32> to vector<1x8x256xf32>
    %21 = vector.broadcast %16 : vector<1x1x256xf32> to vector<1x8x256xf32>
    %22 = arith.mulf %20, %21 : vector<1x8x256xf32>
    %23 = arith.addf %19, %22 : vector<1x8x256xf32>
    %24 = arith.subf %0, %23 : vector<1x8x256xf32>
    %25 = arith.mulf %24, %24 : vector<1x8x256xf32>
    %cst_13 = arith.constant dense<0.000000e+00> : vector<1x256xf32>
    %26 = vector.multi_reduction <add>, %25, %cst_13 [1] : vector<1x8x256xf32> to vector<1x256xf32>
    %27 = vector.shape_cast %26 : vector<1x256xf32> to vector<1x1x256xf32>
    %28 = vector.broadcast %3 : vector<1x8x1xf32> to vector<1x8x256xf32>
    %29 = arith.mulf %25, %28 : vector<1x8x256xf32>
    %cst_14 = arith.constant dense<0.000000e+00> : vector<1x256xf32>
    %30 = vector.multi_reduction <add>, %29, %cst_14 [1] : vector<1x8x256xf32> to vector<1x256xf32>
    %31 = vector.shape_cast %30 : vector<1x256xf32> to vector<1x1x256xf32>
    %cst_15 = arith.constant 2.500000e-01 : f32
    %32 = vector.broadcast %cst_15 : f32 to vector<1x1x256xf32>
    %33 = arith.mulf %31, %32 : vector<1x1x256xf32>
    %cst_16 = arith.constant 9.99999974E-6 : f32
    %34 = vector.broadcast %cst_16 : f32 to vector<1x1x256xf32>
    %35 = arith.addf %33, %34 : vector<1x1x256xf32>
    %36 = math.rsqrt %35 : vector<1x1x256xf32>
    %37 = arith.subf %27, %31 : vector<1x1x256xf32>
    %cst_17 = arith.constant 2.500000e-01 : f32
    %38 = vector.broadcast %cst_17 : f32 to vector<1x1x256xf32>
    %39 = arith.mulf %37, %38 : vector<1x1x256xf32>
    %cst_18 = arith.constant 9.99999974E-6 : f32
    %40 = vector.broadcast %cst_18 : f32 to vector<1x1x256xf32>
    %41 = arith.addf %39, %40 : vector<1x1x256xf32>
    %42 = math.rsqrt %41 : vector<1x1x256xf32>
    %43 = vector.broadcast %3 : vector<1x8x1xf32> to vector<1x8x256xf32>
    %44 = vector.broadcast %36 : vector<1x1x256xf32> to vector<1x8x256xf32>
    %45 = arith.mulf %43, %44 : vector<1x8x256xf32>
    %46 = vector.broadcast %5 : vector<1x8x1xf32> to vector<1x8x256xf32>
    %47 = vector.broadcast %42 : vector<1x1x256xf32> to vector<1x8x256xf32>
    %48 = arith.mulf %46, %47 : vector<1x8x256xf32>
    %49 = arith.addf %45, %48 : vector<1x8x256xf32>
    %50 = arith.mulf %24, %49 : vector<1x8x256xf32>
    %51 = vector.broadcast %1 : vector<1x8x1xf32> to vector<1x8x256xf32>
    %52 = arith.mulf %50, %51 : vector<1x8x256xf32>
    %53 = vector.broadcast %2 : vector<1x8x1xf32> to vector<1x8x256xf32>
    %54 = arith.addf %52, %53 : vector<1x8x256xf32>
    %c0_19 = arith.constant 0 : index
    %c0_20 = arith.constant 0 : index
    %c0_21 = arith.constant 0 : index
    %55 = vector.load %arg4[%c0_19, %c0_20, %c0_21] : memref<1x8x256xf32, #tpu.memory_space<vmem>>, vector<1x8x256xf32>
    tpu.vector_store %arg4[%c0_19, %c0_20, %c0_21], %54 {strides = array<i32>} : memref<1x8x256xf32, #tpu.memory_space<vmem>>, vector<1x8x256xf32>,
    return
  }
  func.func @transform_0(%arg0: i32, %arg1: i32) -> (i32, i32, i32) {
    %c0_i32 = arith.constant 0 : i32
    %c0_i32_0 = arith.constant 0 : i32
    return %arg0, %c0_i32, %arg1 : i32, i32, i32
  }
  func.func @transform_1(%arg0: i32, %arg1: i32) -> (i32, i32, i32) {
    %c0_i32 = arith.constant 0 : i32
    %c0_i32_0 = arith.constant 0 : i32
    %c0_i32_1 = arith.constant 0 : i32
    %c0_i32_2 = arith.constant 0 : i32
    return %c0_i32, %c0_i32_0, %c0_i32_1 : i32, i32, i32
  }
  func.func @transform_2(%arg0: i32, %arg1: i32) -> (i32, i32, i32) {
    %c0_i32 = arith.constant 0 : i32
    %c0_i32_0 = arith.constant 0 : i32
    return %arg0, %c0_i32, %arg1 : i32, i32, i32
  }
}

</mosaic_0001>

<llo_original>
// kernel: tpu_custom_call.1
$region0: #{tpu_custom_call.1}
  #allocation0 [shape = 'u32[]', space=smem, size = 0x4, offset = 0x4, fixed_abs, tag = 'smem constant byte address 0x4 - core index']
  #allocation1 [shape = 'u32[144,128]{1,0:T(1,128)}', space=vmem, size = 0x12000, scoped, tag = 'internal scratch']
  %s0 = inlined_call_operand.hbm [shape: f32[2,8,256], index: 0, kind: input, shape index: {}]
  %s1 = inlined_call_operand.vmem [shape: f32[3,8,1], index: 1, kind: input, shape index: {}]
  %s2 = inlined_call_operand.hbm [shape: f32[2,8,256], index: 2, kind: output, shape index: {}]
  %s3 = sld [smem:[#allocation0]]
  $region45: #{tpu_custom_call.1} parent=0
    _
  %s5 = ssub.s32 1, %s3
  %s6 = scalar_select 0, %s5, %s3
  $region1: #{tpu_custom_call.1} parent=0
    #allocation2 [shape = 'u8[16384]{0}', space=vmem, size = 0x4000, scoped, tag = 'input window, operand 0']
    #allocation3 [shape = 's32[2]{0}', space=sflag, size = 0x8, scoped, tag = 'scoped memory for tpu_custom_call.1']
    #allocation4 [shape = 's32[2]{0}', space=sflag, size = 0x8, scoped, tag = 'scoped memory for tpu_custom_call.1']
    #allocation5 [shape = 'u8[16384]{0}', space=vmem, size = 0x4000, scoped, tag = 'output window, operand 0']
    %7 = vsyncpa [#allocation3], 0
    %s8 = scalar_lea.sflag [#allocation3], 1
    %9 = vsyncpa %s8, 0
    %10 = vsyncpa [#allocation4], 0
    %s11 = scalar_lea.sflag [#allocation4], 1
    %12 = vsyncpa %s11, 0
    loop: start=0, step=1, limit=4
    $region2: #{tpu_custom_call.1} parent=1 // loop_pre_header
      _
    $region3: #{tpu_custom_call.1} parent=1 // loop_header
      %s14 = sphi 0, %s18
      %p15 = scmp.ge.s32.totalorder %s14, 4
      %s21 = sphi 0, %s33
      %s22 = sphi 0, %s29
      %s23 = sphi 0, %s21
      %s24 = sphi 0, %s22
      %s25 = sphi 0, %s23
      %s26 = sphi 0, %s24
      %s38 = sphi 0, %s40
      %s41 = sphi 0, %s38
      %s42 = sphi 0, %s41
      %s58 = sphi 0, %s42
      %s62 = sphi 0, %s62
      %s64 = sphi 0, %s62
      %s65 = sphi 0, %s64
      %s79 = sphi 0, %s65
      %s87 = sphi 0, %s89
      %s90 = sphi 0, %s87
      %s91 = sphi 0, %s90
      %s107 = sphi 0, %s91
    $region4: #{tpu_custom_call.1} parent=1 // loop_header_branch
      %17 = sbr.rel (%p15) target = $region8
    $region5: #{tpu_custom_call.1} parent=1 // loop_body
      %s19 = ssub.s32 %s14, 1
      %s20 = ssub.s32 %s14, 2
      %s27 = sadd.s32 1, %s22
      %p28 = scmp.ge.s32.totalorder %s27, 1
      %s29 = scalar_select %p28, 0, %s27
      %s30 = sadd.s32 1, %s21
      %s31 = scalar_select %p28, %s30, %s21
      %p32 = scmp.ge.s32.totalorder %s31, 2
      %s33 = scalar_select %p32, 0, %s31
      %s34 = ssub.s32 %s21, %s33
      %s35 = ssub.s32 %s22, %s29
      %s36 = sor.u32 %s34, %s35
      %p37 = scmp.eq.s32.totalorder %s36, 0
      %s39 = sadd.s32 %s38, 1
      %s40 = scalar_select %p37, %s38, %s39
      %p43 = pneg %p37
      %p44 = scmp.eq.s32.totalorder %s14, 1
      %p45 = por %p43, %p44
      %p46 = scmp.ne.s32.totalorder %s38, %s41
      %p47 = scmp.eq.s32.totalorder %s14, 0
      %p48 = por %p46, %p47
      %p49 = scmp.ne.s32.totalorder %s38, %s41
      %p50 = scmp.eq.s32.totalorder %s19, 1
      %p51 = por %p49, %p50
      %p52 = scmp.ne.s32.totalorder %s41, %s42
      %p53 = scmp.eq.s32.totalorder %s19, 0
      %p54 = por %p52, %p53
      %p55 = scmp.ne.s32.totalorder %s41, %s42
      %p56 = scmp.eq.s32.totalorder %s20, 1
      %p57 = por %p55, %p56
      %p59 = scmp.ne.s32.totalorder %s42, %s58
      %p60 = scmp.eq.s32.totalorder %s20, 0
      %p61 = por %p59, %p60
      %s63 = sadd.s32 %s62, 1
      %p66 = scmp.eq.s32.totalorder %s14, 1
      %p67 = scmp.ne.s32.totalorder %s62, %s64
      %p68 = scmp.eq.s32.totalorder %s14, 0
      %p69 = por %p67, %p68
      %p70 = scmp.ne.s32.totalorder %s62, %s64
      %p71 = scmp.eq.s32.totalorder %s19, 1
      %p72 = por %p70, %p71
      %p73 = scmp.ne.s32.totalorder %s64, %s65
      %p74 = scmp.eq.s32.totalorder %s19, 0
      %p75 = por %p73, %p74
      %p76 = scmp.ne.s32.totalorder %s64, %s65
      %p77 = scmp.eq.s32.totalorder %s20, 1
      %p78 = por %p76, %p77
      %p80 = scmp.ne.s32.totalorder %s65, %s79
      %p81 = scmp.eq.s32.totalorder %s20, 0
      %p82 = por %p80, %p81
      %s83 = ssub.s32 %s21, %s33
      %s84 = ssub.s32 %s22, %s29
      %s85 = sor.u32 %s83, %s84
      %p86 = scmp.eq.s32.totalorder %s85, 0
      %s88 = sadd.s32 %s87, 1
      %s89 = scalar_select %p86, %s87, %s88
      %p92 = pneg %p86
      %p93 = scmp.eq.s32.totalorder %s14, 1
      %p94 = por %p92, %p93
      %p95 = scmp.ne.s32.totalorder %s87, %s90
      %p96 = scmp.eq.s32.totalorder %s14, 0
      %p97 = por %p95, %p96
      %p98 = scmp.ne.s32.totalorder %s87, %s90
      %p99 = scmp.eq.s32.totalorder %s19, 1
      %p100 = por %p98, %p99
      %p101 = scmp.ne.s32.totalorder %s90, %s91
      %p102 = scmp.eq.s32.totalorder %s19, 0
      %p103 = por %p101, %p102
      %p104 = scmp.ne.s32.totalorder %s90, %s91
      %p105 = scmp.eq.s32.totalorder %s20, 1
      %p106 = por %p104, %p105
      %p108 = scmp.ne.s32.totalorder %s91, %s107
      %p109 = scmp.eq.s32.totalorder %s20, 0
      %p110 = por %p108, %p109
      %p111 = scmp.le.s32.totalorder 1, %s14
      %p112 = scmp.lt.s32.totalorder %s14, 3
      %p113 = pnand %p111, %p112
      %p114 = pneg %p113
      // Predicated region
      $region9: #{tpu_custom_call.1} parent=5 // pred_check
        _
      $region10: #{tpu_custom_call.1} parent=5 // pred_check_branch
        %116 = sbr.rel (%p113) target = $region12
      $region11: #{tpu_custom_call.1} parent=5 // pred_region
        %s117 = ssub.s32 %s14, 1
        // Predicated region
        $region13: #{tpu_custom_call.1} parent=11 // pred_check
          %p118 = pneg %p75
        $region14: #{tpu_custom_call.1} parent=11 // pred_check_branch
          %120 = sbr.rel (%p118) target = $region16
        $region15: #{tpu_custom_call.1} parent=11 // pred_region
          _
        $region16: #{tpu_custom_call.1} parent=11 // pred_fallthru
          _
      $region12: #{tpu_custom_call.1} parent=5 // pred_fallthru
        _
      %p121 = scmp.lt.s32.totalorder %s14, 2
      // Predicated region
      $region17: #{tpu_custom_call.1} parent=5 // pred_check
        %p122 = pneg %p121
      $region18: #{tpu_custom_call.1} parent=5 // pred_check_branch
        %124 = sbr.rel (%p122) target = $region20
      $region19: #{tpu_custom_call.1} parent=5 // pred_region
        // Predicated region
        $region21: #{tpu_custom_call.1} parent=19 // pred_check
          %p125 = pneg %p48
        $region22: #{tpu_custom_call.1} parent=19 // pred_check_branch
          %127 = sbr.rel (%p125) target = $region24
        $region23: #{tpu_custom_call.1} parent=19 // pred_region
          %s128 = sand.u32 %s38, 1
          %s129 = scalar_lea.sflag [#allocation3], %s128
          %s130 = sand.u32 %s38, 1
          %s131 = smul.addr %s130, 16
          %s132 = scalar_lea.vmem [#allocation2], %s131
          %s133 = smul.u32 2, %s22
          %s135 = ssub.s32 256, 256
          %136 = vsyncadd %s129, %s135
          %s137 = smul.addr %s21, 2
          %s138 = sadd.s32 %s133, %s137
          %s139 = smul.addr %s138, 128
          %s140 = scalar_lea.hbm %s0, %s139
          %s142 = sshll.u32 %s132, 4
          %s143 = int_to_ptr.vmem [resolvable:$true] %s142
          %145 = dma.hbm_to_vmem [thread:$0]  %s140, 256, %s143, %s129
        $region24: #{tpu_custom_call.1} parent=19 // pred_fallthru
          _
      $region20: #{tpu_custom_call.1} parent=5 // pred_fallthru
        _
      %p146 = scmp.le.s32.totalorder 1, %s14
      %p147 = scmp.lt.s32.totalorder %s14, 3
      %p148 = pnand %p146, %p147
      %p149 = pneg %p148
      // Predicated region
      $region25: #{tpu_custom_call.1} parent=5 // pred_check
        _
      $region26: #{tpu_custom_call.1} parent=5 // pred_check_branch
        %151 = sbr.rel (%p148) target = $region28
      $region27: #{tpu_custom_call.1} parent=5 // pred_region
        %s152 = ssub.s32 %s14, 1
        %s153 = sand.u32 %s41, 1
        %s154 = scalar_lea.sflag [#allocation3], %s153
        %s155 = sand.u32 %s41, 1
        %s156 = smul.addr %s155, 16
        %s157 = scalar_lea.vmem [#allocation2], %s156
        // Predicated region
        $region29: #{tpu_custom_call.1} parent=27 // pred_check
          %p158 = pneg %p54
        $region30: #{tpu_custom_call.1} parent=27 // pred_check_branch
          %160 = sbr.rel (%p158) target = $region32
        $region31: #{tpu_custom_call.1} parent=27 // pred_region
          %161 = dma.done %s154, 256
        $region32: #{tpu_custom_call.1} parent=27 // pred_fallthru
          _
        %s162 = sand.u32 %s41, 1
        %s163 = scalar_lea.sflag [#allocation3], %s162
        %s164 = sand.u32 %s41, 1
        %s165 = smul.addr %s164, 16
        %s166 = scalar_lea.vmem [#allocation2], %s165
        %p167 = pneg %p54
        %p168 = pneg %p51
        %p169 = pneg %p75
        %p170 = pneg %p72
        %p171 = pneg %p103
        %p172 = pneg %p100
        %s173 = sand.u32 %s90, 1
        %s174 = scalar_lea.sflag [#allocation4], %s173
        %s175 = sand.u32 %s90, 1
        %s176 = smul.addr %s175, 16
        %s177 = scalar_lea.vmem [#allocation5], %s176
        %s178 = smul.u32 2, %s24
        %s179 = smul.u32 2, %s24
        %v180 = vld [vmem:[%s157] sm:$0xff]
        %v181 = vld [vmem:[%s157 + $0x8] sm:$0xff]
        %v182 = vld [vmem:[%s1] sm:$0xff]
        %s183 = scalar_lea.vmem %s1, 8
        %v184 = vld [vmem:[%s183] sm:$0xff]
        %s185 = scalar_lea.vmem %s1, 16
        %v186 = vld [vmem:[%s185] sm:$0xff]
        %v187 = vsub.f32 1.0, %v186
        %v188 = vrot.slane %v180, 4
        %v189 = vadd.f32 %v180, %v188
        %v190 = vrot.slane %v189, 2
        %v191 = vadd.f32 %v189, %v190
        %v192 = vrot.slane %v191, 1
        %v193 = vadd.f32 %v191, %v192
        %v194 = vrot.slane %v181, 4
        %v195 = vadd.f32 %v181, %v194
        %v196 = vrot.slane %v195, 2
        %v197 = vadd.f32 %v195, %v196
        %v198 = vrot.slane %v197, 1
        %v199 = vadd.f32 %v197, %v198
        %201 = vset.pattern.permute.xlu0 0
        %202 = vperm.xlu0 %201, %v186
        %v203 = vpop.permute.xlu0 %202
        %v205 = vmul.f32 %v180, %v203
        %v206 = vmul.f32 %v181, %v203
        %v207 = vrot.slane %v205, 4
        %v208 = vadd.f32 %v205, %v207
        %v209 = vrot.slane %v208, 2
        %v210 = vadd.f32 %v208, %v209
        %v211 = vrot.slane %v210, 1
        %v212 = vadd.f32 %v210, %v211
        %v213 = vrot.slane %v206, 4
        %v214 = vadd.f32 %v206, %v213
        %v215 = vrot.slane %v214, 2
        %v216 = vadd.f32 %v214, %v215
        %v217 = vrot.slane %v216, 1
        %v218 = vadd.f32 %v216, %v217
        %v219 = vmul.f32 %v212, 0.25
        %v220 = vmul.f32 %v218, 0.25
        %v221 = vsub.f32 %v193, %v212
        %v222 = vsub.f32 %v199, %v218
        %v223 = vmul.f32 %v221, 0.25
        %v224 = vmul.f32 %v222, 0.25
        %v225 = vmul.f32 %v203, %v219
        %v226 = vmul.f32 %v203, %v220
        %228 = vset.pattern.permute.xlu0 0
        %229 = vperm.xlu0 %228, %v187
        %v230 = vpop.permute.xlu0 %229
        %v232 = vmul.f32 %v230, %v223
        %v233 = vmul.f32 %v230, %v224
        %v234 = vadd.f32 %v225, %v232
        %v235 = vadd.f32 %v226, %v233
        %v236 = vsub.f32 %v180, %v234
        %v237 = vsub.f32 %v181, %v235
        %v238 = vmul.f32 %v236, %v236
        %v239 = vmul.f32 %v237, %v237
        %v240 = vrot.slane %v238, 4
        %v241 = vadd.f32 %v238, %v240
        %v242 = vrot.slane %v241, 2
        %v243 = vadd.f32 %v241, %v242
        %v244 = vrot.slane %v243, 1
        %v245 = vadd.f32 %v243, %v244
        %v246 = vrot.slane %v239, 4
        %v247 = vadd.f32 %v239, %v246
        %v248 = vrot.slane %v247, 2
        %v249 = vadd.f32 %v247, %v248
        %v250 = vrot.slane %v249, 1
        %v251 = vadd.f32 %v249, %v250
        %v252 = vmul.f32 %v238, %v203
        %v253 = vmul.f32 %v239, %v203
        %v254 = vrot.slane %v252, 4
        %v255 = vadd.f32 %v252, %v254
        %v256 = vrot.slane %v255, 2
        %v257 = vadd.f32 %v255, %v256
        %v258 = vrot.slane %v257, 1
        %v259 = vadd.f32 %v257, %v258
        %v260 = vrot.slane %v253, 4
        %v261 = vadd.f32 %v253, %v260
        %v262 = vrot.slane %v261, 2
        %v263 = vadd.f32 %v261, %v262
        %v264 = vrot.slane %v263, 1
        %v265 = vadd.f32 %v263, %v264
        %v266 = vmul.f32 %v259, 0.25
        %v267 = vmul.f32 %v265, 0.25
        %v268 = vadd.f32 %v266, 1e-05
        %v269 = vadd.f32 %v267, 1e-05
        %v270 = vrsqrt.pop %v268
        %v271 = vrsqrt.pop %v269
        %v272 = vsub.f32 %v245, %v259
        %v273 = vsub.f32 %v251, %v265
        %v274 = vmul.f32 %v272, 0.25
        %v275 = vmul.f32 %v273, 0.25
        %v276 = vadd.f32 %v274, 1e-05
        %v277 = vadd.f32 %v275, 1e-05
        %v278 = vrsqrt.pop %v276
        %v279 = vrsqrt.pop %v277
        %v280 = vmul.f32 %v203, %v270
        %v281 = vmul.f32 %v203, %v271
        %v282 = vmul.f32 %v230, %v278
        %v283 = vmul.f32 %v230, %v279
        %v284 = vadd.f32 %v280, %v282
        %v285 = vadd.f32 %v281, %v283
        %v286 = vmul.f32 %v236, %v284
        %v287 = vmul.f32 %v237, %v285
        %289 = vset.pattern.permute.xlu0 0
        %290 = vperm.xlu0 %289, %v182
        %v291 = vpop.permute.xlu0 %290
        %v293 = vmul.f32 %v286, %v291
        %v294 = vmul.f32 %v287, %v291
        %296 = vset.pattern.permute.xlu0 0
        %297 = vperm.xlu0 %296, %v184
        %v298 = vpop.permute.xlu0 %297
        %v300 = vadd.f32 %v293, %v298
        %v301 = vadd.f32 %v294, %v298
        %302 = vst [vmem:[%s177] sm:$0xff] %v300
        %303 = vst [vmem:[%s177 + $0x8] sm:$0xff] %v301
        %s304 = sand.u32 %s90, 1
        %s305 = scalar_lea.sflag [#allocation4], %s304
        %s306 = sand.u32 %s90, 1
        %s307 = smul.addr %s306, 16
        %s308 = scalar_lea.vmem [#allocation5], %s307
        // Predicated region
        $region33: #{tpu_custom_call.1} parent=27 // pred_check
          %p309 = pneg %p100
        $region34: #{tpu_custom_call.1} parent=27 // pred_check_branch
          %311 = sbr.rel (%p309) target = $region36
        $region35: #{tpu_custom_call.1} parent=27 // pred_region
          %s312 = smul.u32 2, %s24
          %s314 = ssub.s32 256, 256
          %315 = vsyncadd %s305, %s314
          %s316 = smul.addr %s23, 2
          %s317 = sadd.s32 %s312, %s316
          %s318 = smul.addr %s317, 128
          %s319 = scalar_lea.hbm %s2, %s318
          %s321 = sshll.u32 %s308, 4
          %s322 = int_to_ptr.vmem [resolvable:$true] %s321
          %324 = dma.vmem_to_hbm [thread:$0]  %s322, 256, %s319, %s305
        $region36: #{tpu_custom_call.1} parent=27 // pred_fallthru
          _
      $region28: #{tpu_custom_call.1} parent=5 // pred_fallthru
        _
      %p325 = scmp.le.s32.totalorder 2, %s14
      // Predicated region
      $region37: #{tpu_custom_call.1} parent=5 // pred_check
        %p326 = pneg %p325
      $region38: #{tpu_custom_call.1} parent=5 // pred_check_branch
        %328 = sbr.rel (%p326) target = $region40
      $region39: #{tpu_custom_call.1} parent=5 // pred_region
        %s329 = ssub.s32 %s14, 2
        // Predicated region
        $region41: #{tpu_custom_call.1} parent=39 // pred_check
          %p330 = pneg %p106
        $region42: #{tpu_custom_call.1} parent=39 // pred_check_branch
          %332 = sbr.rel (%p330) target = $region44
        $region43: #{tpu_custom_call.1} parent=39 // pred_region
          %s333 = sand.u32 %s91, 1
          %s334 = scalar_lea.sflag [#allocation4], %s333
          %s335 = sand.u32 %s91, 1
          %s336 = smul.addr %s335, 16
          %s337 = scalar_lea.vmem [#allocation5], %s336
          %338 = dma.done %s334, 256
        $region44: #{tpu_custom_call.1} parent=39 // pred_fallthru
          _
      $region40: #{tpu_custom_call.1} parent=5 // pred_fallthru
        _
    $region6: #{tpu_custom_call.1} parent=1 // loop_footer
      %s18 = sadd.s32 1, %s14
    $region7: #{tpu_custom_call.1} parent=1 // loop_footer_branch
      %13 = sbr.rel target = $region3
    $region8: #{tpu_custom_call.1} parent=1 // loop_exit
      _
    %339 = vsyncpa [#allocation3], 1
    %s340 = scalar_lea.sflag [#allocation3], 1
    %341 = vsyncpa %s340, 1
    %342 = vsyncpa [#allocation4], 1
    %s343 = scalar_lea.sflag [#allocation4], 1
    %344 = vsyncpa %s343, 1

</llo_original>
